<compile_context>
chip_gen: v7x
topology: tpu7x:2x2x1
jax: 0.10.0
libtpu: 0.0.40
codegen_flags: <defaults>
</compile_context>

<pallas_src>
import functools

import jax
import jax.numpy as jnp
from jax.experimental import pallas as pl
from jax.experimental.pallas import tpu as pltpu

INPUT_DIM = 5
HIDDEN_DIMS = [64, 32, 16]
LATENT_DIM = 8

IN_ROWS = LATENT_DIM + INPUT_DIM        # packed input stream  [eps^T ; x^T]            (13, N)
OUT_ROWS = 2 * LATENT_DIM + INPUT_DIM   # packed output stream [mu ; logvar ; recon]^T  (21, N)


def _round_up(a, b):
    return ((a + b - 1) // b) * b


def _layer_dims():
    """(in_dim, out_dim) for every linear layer, in kernel execution order."""
    dims = []
    prev = INPUT_DIM
    for h in HIDDEN_DIMS:                       # encoder
        dims.append((prev, h))
        prev = h
    dims.append((prev, 2 * LATENT_DIM))         # fused fc_mu / fc_logvar head
    prev = LATENT_DIM
    for h in reversed(HIDDEN_DIMS):             # decoder hidden
        dims.append((prev, h))
        prev = h
    dims.append((prev, INPUT_DIM))              # final decoder layer (no relu)
    return dims


_LAYER_DIMS = _layer_dims()
_ROW_OFFS = []
_off = 0
for _din, _dout in _LAYER_DIMS:
    _ROW_OFFS.append(_off)
    _off += _dout
SLAB_ROWS = _off                                # 245
SLAB_ROWS_PAD = _round_up(SLAB_ROWS, 8)         # 248 (sublane aligned)
W_COLS = max(d for d, _ in _LAYER_DIMS)         # 64  (common in-dim for the weight slab)


# --------------------------------------------------------------------------------------
# Kernel
# --------------------------------------------------------------------------------------
def _vae_kernel(xe_ref, w_ref, b_ref, out_ref):
    f32 = jnp.float32
    n_enc = len(HIDDEN_DIMS)

    def layer(idx, h, relu):
        off = _ROW_OFFS[idx]
        din, dout = _LAYER_DIMS[idx]
        # Static slices of the VMEM-resident packed slabs (all row offsets are
        # multiples of 8, so these are cheap aligned sub-views).
        w = w_ref[off:off + dout, 0:din].astype(f32)
        b = b_ref[off:off + dout, :].astype(f32)
        y = jnp.dot(w, h, preferred_element_type=f32) + b
        # Dropout is identity in eval mode.
        return jnp.maximum(y, 0.0) if relu else y

    xe = xe_ref[...].astype(f32)                 # (13, T): rows 0..7 eps^T, 8..12 x^T
    eps = xe[:LATENT_DIM, :]
    h = xe[LATENT_DIM:, :]

    # ---- encoder ----
    for i in range(n_enc):
        h = layer(i, h, True)

    # ---- fused latent heads (one MXU pass) ----
    heads = layer(n_enc, h, False)               # (2*LATENT, T): rows 0..7 mu, 8..15 logvar
    mu = heads[:LATENT_DIM, :]
    logvar = heads[LATENT_DIM:, :]

    # ---- reparameterization trick ----
    z = mu + eps * jnp.exp(0.5 * logvar)

    # ---- decoder ----
    d = z
    for i in range(n_enc + 1, 2 * n_enc + 1):
        d = layer(i, d, True)
    recon = layer(2 * n_enc + 1, d, False)       # (INPUT_DIM, T)

    # Packed, lane-dense output (two sublane-aligned stores, no masked partial lanes).
    out_ref[0:2 * LATENT_DIM, :] = heads.astype(out_ref.dtype)
    out_ref[2 * LATENT_DIM:, :] = recon.astype(out_ref.dtype)


# --------------------------------------------------------------------------------------
# Parameters
# --------------------------------------------------------------------------------------
def _init_linear(key, fan_in, fan_out):
    """PyTorch nn.Linear default init. Weight (out, in), bias (out, 1)."""
    kw, kb = jax.random.split(key)
    bound = 1.0 / (fan_in ** 0.5)
    w = jax.random.uniform(kw, (fan_out, fan_in), jnp.float32, -bound, bound)
    b = jax.random.uniform(kb, (fan_out, 1), jnp.float32, -bound, bound)
    return w, b


def init_vae_params(key):
    dims = [INPUT_DIM] + HIDDEN_DIMS
    keys = jax.random.split(key, 2 * len(HIDDEN_DIMS) + 3)
    ki = 0
    enc = []
    for i in range(len(HIDDEN_DIMS)):
        enc.append(_init_linear(keys[ki], dims[i], dims[i + 1])); ki += 1
    mu_head = _init_linear(keys[ki], HIDDEN_DIMS[-1], LATENT_DIM); ki += 1
    lv_head = _init_linear(keys[ki], HIDDEN_DIMS[-1], LATENT_DIM); ki += 1
    dec = []
    prev = LATENT_DIM
    for hdim in reversed(HIDDEN_DIMS):
        dec.append(_init_linear(keys[ki], prev, hdim)); ki += 1
        prev = hdim
    dec.append(_init_linear(keys[ki], prev, INPUT_DIM)); ki += 1
    return {"enc": enc, "mu": mu_head, "logvar": lv_head, "dec": dec}


def pack_vae_params(params, dtype=jnp.float32):
    """Pack all 18 weight/bias tensors into two constant slabs (once per param set).

    dtype=jnp.bfloat16 enables bf16 streaming (v6e/v7x); f32 keeps exact eval semantics.
    """
    layers = list(params["enc"])
    wmu, bmu = params["mu"]
    wlv, blv = params["logvar"]
    layers.append((jnp.concatenate([wmu, wlv], axis=0),
                   jnp.concatenate([bmu, blv], axis=0)))
    layers += list(params["dec"])

    w_slab = jnp.zeros((SLAB_ROWS_PAD, W_COLS), jnp.float32)
    b_slab = jnp.zeros((SLAB_ROWS_PAD, 1), jnp.float32)
    for (w, b), off, (din, dout) in zip(layers, _ROW_OFFS, _LAYER_DIMS):
        assert w.shape == (dout, din) and b.shape == (dout, 1)
        w_slab = w_slab.at[off:off + dout, :din].set(w)
        b_slab = b_slab.at[off:off + dout, :].set(b)
    return w_slab.astype(dtype), b_slab.astype(dtype)


# --------------------------------------------------------------------------------------
# Forward (jitted wrapper: layout plumbing fuses with the pallas_call)
# --------------------------------------------------------------------------------------
@functools.partial(jax.jit, static_argnames=("tile_n",))
def vae_forward(x, eps, w_slab, b_slab, *, tile_n=8192):
    """Full VAE forward in one tiled Pallas kernel.

    x      : (N, INPUT_DIM)  float32
    eps    : (N, LATENT_DIM) float32 (standard-normal noise for reparameterization)
    w_slab, b_slab : from pack_vae_params(params)
    Returns (reconstruction (N, INPUT_DIM), mu (N, LATENT_DIM), logvar (N, LATENT_DIM)).
    """
    n = x.shape[0]
    sdt = w_slab.dtype  # stream dtype (f32 default; bf16 opt-in for v6e/v7x)

    n128 = _round_up(max(n, 1), 128)
    # Cap the tile so large batches always get >=2 grid steps: the "parallel" grid
    # axis then shards across v7x's two TensorCores (no-op on v5e/v6e).
    cap = max(128, ((n128 // 2) // 128) * 128)
    tile = max(128, (min(int(tile_n), cap) // 128) * 128)
    n_pad = _round_up(n, tile)

    # Batch-on-lanes packed input stream [eps^T ; x^T], padded once (no zeros+scatter).
    # Padded lanes are zero -> safe, and every in-kernel op is lane-local anyway
    # (matmuls contract over the feature/sublane axis).
    xe = jnp.concatenate([eps.T, x.T], axis=0).astype(sdt)   # (13, N)
    xe = jnp.pad(xe, ((0, 0), (0, n_pad - n)))               # (13, n_pad)

    out = pl.pallas_call(
        _vae_kernel,
        grid=(n_pad // tile,),
        in_specs=[
            pl.BlockSpec((IN_ROWS, tile), lambda i: (0, i)),          # streamed x/eps
            pl.BlockSpec((SLAB_ROWS_PAD, W_COLS), lambda i: (0, 0)),  # weight slab (resident)
            pl.BlockSpec((SLAB_ROWS_PAD, 1), lambda i: (0, 0)),       # bias slab (resident)
        ],
        out_specs=pl.BlockSpec((OUT_ROWS, tile), lambda i: (0, i)),   # packed mu/logvar/recon
        out_shape=jax.ShapeDtypeStruct((OUT_ROWS, n_pad), sdt),
        compiler_params=pltpu.CompilerParams(
            dimension_semantics=("parallel",),
            vmem_limit_bytes=32 * 1024 * 1024,
        ),
    )(xe, w_slab, b_slab)

    out = out[:, :n].astype(jnp.float32)
    mu = out[:LATENT_DIM, :].T
    logvar = out[LATENT_DIM:2 * LATENT_DIM, :].T
    recon = out[2 * LATENT_DIM:, :].T
    return recon, mu, logvar


# --------------------------------------------------------------------------------------
# Pure-JAX reference (batch-major layout) for correctness checking
# --------------------------------------------------------------------------------------
def _reference_forward(x, eps, params):
    hi = jax.lax.Precision.HIGHEST

    def lin(h, wb):
        w, b = wb
        return jnp.dot(h, w.T, precision=hi) + b[:, 0]

    h = x
    for wb in params["enc"]:
        h = jnp.maximum(lin(h, wb), 0.0)
    mu = lin(h, params["mu"])
    logvar = lin(h, params["logvar"])
    z = mu + eps * jnp.exp(0.5 * logvar)
    d = z
    for wb in params["dec"][:-1]:
        d = jnp.maximum(lin(d, wb), 0.0)
    recon = lin(d, params["dec"][-1])
    return recon, mu, logvar


if __name__ == "__main__":
    key = jax.random.PRNGKey(0)
    k_params, k_data = jax.random.split(key)

    params = init_vae_params(k_params)
    w_slab, b_slab = pack_vae_params(params)   # packed once per parameter set

    def check(batch, **kw):
        kx, ke = jax.random.split(jax.random.fold_in(k_data, batch))
        x = jax.random.normal(kx, (batch, INPUT_DIM), jnp.float32)
        eps = jax.random.normal(ke, (batch, LATENT_DIM), jnp.float32)
        recon, mu, logvar = jax.block_until_ready(
            vae_forward(x, eps, w_slab, b_slab, **kw))
        r_ref, m_ref, l_ref = _reference_forward(x, eps, params)
        assert recon.shape == (batch, INPUT_DIM)
        assert mu.shape == (batch, LATENT_DIM)
        assert logvar.shape == (batch, LATENT_DIM)
        assert jnp.allclose(recon, r_ref, rtol=1e-4, atol=1e-4)
        assert jnp.allclose(mu, m_ref, rtol=1e-4, atol=1e-4)
        assert jnp.allclose(logvar, l_ref, rtol=1e-4, atol=1e-4)

    check(8)                 # small batch -> single 128-wide tile, grid = 1
    check(300, tile_n=128)   # ragged batch, explicit small tile -> grid = 3 (pipelining)
    check(2000)              # default big tile, auto-capped so grid = 2 (v7x 2-TC path)

    print("KERNEL_OK")
</pallas_src>

<mosaic_0001>
module attributes {stable_mosaic.version = 11 : i64} {
  func.func @_vae_kernel(%arg0: i32, %arg1: memref<13x128xf32, #tpu.memory_space<vmem>>, %arg2: memref<248x64xf32, #tpu.memory_space<vmem>>, %arg3: memref<248x1xf32, #tpu.memory_space<vmem>>, %arg4: memref<21x128xf32, #tpu.memory_space<vmem>>) attributes {dimension_semantics = [#tpu.dimension_semantics<parallel>], iteration_bounds = array<i64: 1>, scalar_prefetch = 0 : i64, scratch_operands = 0 : i64, tpu.core_type = #tpu.core_type<tc>, window_params = [{transform_indices = @transform_0, window_bounds = array<i64: 13, 128>}, {pipeline_mode = #tpu.pipeline_mode<synchronous>, transform_indices = @transform_1, window_bounds = array<i64: 248, 64>}, {pipeline_mode = #tpu.pipeline_mode<synchronous>, transform_indices = @transform_2, window_bounds = array<i64: 248, 1>}, {transform_indices = @transform_3, window_bounds = array<i64: 21, 128>}]} {
    %c0 = arith.constant 0 : index
    %c0_0 = arith.constant 0 : index
    %0 = vector.load %arg1[%c0, %c0_0] : memref<13x128xf32, #tpu.memory_space<vmem>>, vector<13x128xf32>
    %1 = vector.extract_strided_slice %0 {offsets = [0, 0], sizes = [8, 128], strides = [1, 1]} : vector<13x128xf32> to vector<8x128xf32>
    %2 = vector.extract_strided_slice %0 {offsets = [8, 0], sizes = [5, 128], strides = [1, 1]} : vector<13x128xf32> to vector<5x128xf32>
    %c0_1 = arith.constant 0 : index
    %c0_2 = arith.constant 0 : index
    %3 = vector.load %arg2[%c0_1, %c0_2] : memref<248x64xf32, #tpu.memory_space<vmem>>, vector<64x5xf32>
    %c0_3 = arith.constant 0 : index
    %c0_4 = arith.constant 0 : index
    %4 = vector.load %arg3[%c0_3, %c0_4] : memref<248x1xf32, #tpu.memory_space<vmem>>, vector<64x1xf32>
    %cst = arith.constant dense<0.000000e+00> : vector<64x128xf32>
    %5 = tpu.matmul %3, %2, %cst {dimension_numbers = #tpu.dot_dimension_numbers<[1], [0], [0], [1], [0, 0, 1, 1], [], []>} : vector<64x5xf32>, vector<5x128xf32>, vector<64x128xf32> -> vector<64x128xf32>
    %6 = vector.broadcast %4 : vector<64x1xf32> to vector<64x128xf32>
    %7 = arith.addf %5, %6 : vector<64x128xf32>
    %cst_5 = arith.constant 0.000000e+00 : f32
    %8 = vector.broadcast %cst_5 : f32 to vector<64x128xf32>
    %9 = arith.maximumf %7, %8 : vector<64x128xf32>
    %c64 = arith.constant 64 : index
    %c0_6 = arith.constant 0 : index
    %10 = vector.load %arg2[%c64, %c0_6] : memref<248x64xf32, #tpu.memory_space<vmem>>, vector<32x64xf32>
    %c64_7 = arith.constant 64 : index
    %c0_8 = arith.constant 0 : index
    %11 = vector.load %arg3[%c64_7, %c0_8] : memref<248x1xf32, #tpu.memory_space<vmem>>, vector<32x1xf32>
    %cst_9 = arith.constant dense<0.000000e+00> : vector<32x128xf32>
    %12 = tpu.matmul %10, %9, %cst_9 {dimension_numbers = #tpu.dot_dimension_numbers<[1], [0], [0], [1], [0, 0, 1, 1], [], []>} : vector<32x64xf32>, vector<64x128xf32>, vector<32x128xf32> -> vector<32x128xf32>
    %13 = vector.broadcast %11 : vector<32x1xf32> to vector<32x128xf32>
    %14 = arith.addf %12, %13 : vector<32x128xf32>
    %cst_10 = arith.constant 0.000000e+00 : f32
    %15 = vector.broadcast %cst_10 : f32 to vector<32x128xf32>
    %16 = arith.maximumf %14, %15 : vector<32x128xf32>
    %c96 = arith.constant 96 : index
    %c0_11 = arith.constant 0 : index
    %17 = vector.load %arg2[%c96, %c0_11] : memref<248x64xf32, #tpu.memory_space<vmem>>, vector<16x32xf32>
    %c96_12 = arith.constant 96 : index
    %c0_13 = arith.constant 0 : index
    %18 = vector.load %arg3[%c96_12, %c0_13] : memref<248x1xf32, #tpu.memory_space<vmem>>, vector<16x1xf32>
    %cst_14 = arith.constant dense<0.000000e+00> : vector<16x128xf32>
    %19 = tpu.matmul %17, %16, %cst_14 {dimension_numbers = #tpu.dot_dimension_numbers<[1], [0], [0], [1], [0, 0, 1, 1], [], []>} : vector<16x32xf32>, vector<32x128xf32>, vector<16x128xf32> -> vector<16x128xf32>
    %20 = vector.broadcast %18 : vector<16x1xf32> to vector<16x128xf32>
    %21 = arith.addf %19, %20 : vector<16x128xf32>
    %cst_15 = arith.constant 0.000000e+00 : f32
    %22 = vector.broadcast %cst_15 : f32 to vector<16x128xf32>
    %23 = arith.maximumf %21, %22 : vector<16x128xf32>
    %c112 = arith.constant 112 : index
    %c0_16 = arith.constant 0 : index
    %24 = vector.load %arg2[%c112, %c0_16] : memref<248x64xf32, #tpu.memory_space<vmem>>, vector<16x16xf32>
    %c112_17 = arith.constant 112 : index
    %c0_18 = arith.constant 0 : index
    %25 = vector.load %arg3[%c112_17, %c0_18] : memref<248x1xf32, #tpu.memory_space<vmem>>, vector<16x1xf32>
    %cst_19 = arith.constant dense<0.000000e+00> : vector<16x128xf32>
    %26 = tpu.matmul %24, %23, %cst_19 {dimension_numbers = #tpu.dot_dimension_numbers<[1], [0], [0], [1], [0, 0, 1, 1], [], []>} : vector<16x16xf32>, vector<16x128xf32>, vector<16x128xf32> -> vector<16x128xf32>
    %27 = vector.broadcast %25 : vector<16x1xf32> to vector<16x128xf32>
    %28 = arith.addf %26, %27 : vector<16x128xf32>
    %29 = vector.extract_strided_slice %28 {offsets = [0, 0], sizes = [8, 128], strides = [1, 1]} : vector<16x128xf32> to vector<8x128xf32>
    %30 = vector.extract_strided_slice %28 {offsets = [8, 0], sizes = [8, 128], strides = [1, 1]} : vector<16x128xf32> to vector<8x128xf32>
    %cst_20 = arith.constant 5.000000e-01 : f32
    %31 = vector.broadcast %cst_20 : f32 to vector<8x128xf32>
    %32 = arith.mulf %31, %30 : vector<8x128xf32>
    %33 = math.exp %32 : vector<8x128xf32>
    %34 = arith.mulf %1, %33 : vector<8x128xf32>
    %35 = arith.addf %29, %34 : vector<8x128xf32>
    %c128 = arith.constant 128 : index
    %c0_21 = arith.constant 0 : index
    %36 = vector.load %arg2[%c128, %c0_21] : memref<248x64xf32, #tpu.memory_space<vmem>>, vector<16x8xf32>
    %c128_22 = arith.constant 128 : index
    %c0_23 = arith.constant 0 : index
    %37 = vector.load %arg3[%c128_22, %c0_23] : memref<248x1xf32, #tpu.memory_space<vmem>>, vector<16x1xf32>
    %cst_24 = arith.constant dense<0.000000e+00> : vector<16x128xf32>
    %38 = tpu.matmul %36, %35, %cst_24 {dimension_numbers = #tpu.dot_dimension_numbers<[1], [0], [0], [1], [0, 0, 1, 1], [], []>} : vector<16x8xf32>, vector<8x128xf32>, vector<16x128xf32> -> vector<16x128xf32>
    %39 = vector.broadcast %37 : vector<16x1xf32> to vector<16x128xf32>
    %40 = arith.addf %38, %39 : vector<16x128xf32>
    %cst_25 = arith.constant 0.000000e+00 : f32
    %41 = vector.broadcast %cst_25 : f32 to vector<16x128xf32>
    %42 = arith.maximumf %40, %41 : vector<16x128xf32>
    %c144 = arith.constant 144 : index
    %c0_26 = arith.constant 0 : index
    %43 = vector.load %arg2[%c144, %c0_26] : memref<248x64xf32, #tpu.memory_space<vmem>>, vector<32x16xf32>
    %c144_27 = arith.constant 144 : index
    %c0_28 = arith.constant 0 : index
    %44 = vector.load %arg3[%c144_27, %c0_28] : memref<248x1xf32, #tpu.memory_space<vmem>>, vector<32x1xf32>
    %cst_29 = arith.constant dense<0.000000e+00> : vector<32x128xf32>
    %45 = tpu.matmul %43, %42, %cst_29 {dimension_numbers = #tpu.dot_dimension_numbers<[1], [0], [0], [1], [0, 0, 1, 1], [], []>} : vector<32x16xf32>, vector<16x128xf32>, vector<32x128xf32> -> vector<32x128xf32>
    %46 = vector.broadcast %44 : vector<32x1xf32> to vector<32x128xf32>
    %47 = arith.addf %45, %46 : vector<32x128xf32>
    %cst_30 = arith.constant 0.000000e+00 : f32
    %48 = vector.broadcast %cst_30 : f32 to vector<32x128xf32>
    %49 = arith.maximumf %47, %48 : vector<32x128xf32>
    %c176 = arith.constant 176 : index
    %c0_31 = arith.constant 0 : index
    %50 = vector.load %arg2[%c176, %c0_31] : memref<248x64xf32, #tpu.memory_space<vmem>>, vector<64x32xf32>
    %c176_32 = arith.constant 176 : index
    %c0_33 = arith.constant 0 : index
    %51 = vector.load %arg3[%c176_32, %c0_33] : memref<248x1xf32, #tpu.memory_space<vmem>>, vector<64x1xf32>
    %cst_34 = arith.constant dense<0.000000e+00> : vector<64x128xf32>
    %52 = tpu.matmul %50, %49, %cst_34 {dimension_numbers = #tpu.dot_dimension_numbers<[1], [0], [0], [1], [0, 0, 1, 1], [], []>} : vector<64x32xf32>, vector<32x128xf32>, vector<64x128xf32> -> vector<64x128xf32>
    %53 = vector.broadcast %51 : vector<64x1xf32> to vector<64x128xf32>
    %54 = arith.addf %52, %53 : vector<64x128xf32>
    %cst_35 = arith.constant 0.000000e+00 : f32
    %55 = vector.broadcast %cst_35 : f32 to vector<64x128xf32>
    %56 = arith.maximumf %54, %55 : vector<64x128xf32>
    %c240 = arith.constant 240 : index
    %c0_36 = arith.constant 0 : index
    %57 = vector.load %arg2[%c240, %c0_36] : memref<248x64xf32, #tpu.memory_space<vmem>>, vector<5x64xf32>
    %c240_37 = arith.constant 240 : index
    %c0_38 = arith.constant 0 : index
    %58 = vector.load %arg3[%c240_37, %c0_38] : memref<248x1xf32, #tpu.memory_space<vmem>>, vector<5x1xf32>
    %cst_39 = arith.constant dense<0.000000e+00> : vector<5x128xf32>
    %59 = tpu.matmul %57, %56, %cst_39 {dimension_numbers = #tpu.dot_dimension_numbers<[1], [0], [0], [1], [0, 0, 1, 1], [], []>} : vector<5x64xf32>, vector<64x128xf32>, vector<5x128xf32> -> vector<5x128xf32>
    %60 = vector.broadcast %58 : vector<5x1xf32> to vector<5x128xf32>
    %61 = arith.addf %59, %60 : vector<5x128xf32>
    %c0_40 = arith.constant 0 : index
    %c0_41 = arith.constant 0 : index
    %62 = vector.load %arg4[%c0_40, %c0_41] : memref<21x128xf32, #tpu.memory_space<vmem>>, vector<16x128xf32>
    tpu.vector_store %arg4[%c0_40, %c0_41], %28 {strides = array<i32>} : memref<21x128xf32, #tpu.memory_space<vmem>>, vector<16x128xf32>,
    %c16 = arith.constant 16 : index
    %c0_42 = arith.constant 0 : index
    %63 = vector.load %arg4[%c16, %c0_42] : memref<21x128xf32, #tpu.memory_space<vmem>>, vector<5x128xf32>
    tpu.vector_store %arg4[%c16, %c0_42], %61 {strides = array<i32>} : memref<21x128xf32, #tpu.memory_space<vmem>>, vector<5x128xf32>,
    return
  }
  func.func @transform_0(%arg0: i32) -> (i32, i32) {
    %c0_i32 = arith.constant 0 : i32
    %c0_i32_0 = arith.constant 0 : i32
    return %c0_i32, %arg0 : i32, i32
  }
  func.func @transform_1(%arg0: i32) -> (i32, i32) {
    %c0_i32 = arith.constant 0 : i32
    %c0_i32_0 = arith.constant 0 : i32
    %c0_i32_1 = arith.constant 0 : i32
    return %c0_i32, %c0_i32_0 : i32, i32
  }
  func.func @transform_2(%arg0: i32) -> (i32, i32) {
    %c0_i32 = arith.constant 0 : i32
    %c0_i32_0 = arith.constant 0 : i32
    %c0_i32_1 = arith.constant 0 : i32
    return %c0_i32, %c0_i32_0 : i32, i32
  }
  func.func @transform_3(%arg0: i32) -> (i32, i32) {
    %c0_i32 = arith.constant 0 : i32
    %c0_i32_0 = arith.constant 0 : i32
    return %c0_i32, %arg0 : i32, i32
  }
}

</mosaic_0001>

<llo_original>
// kernel: vae_forward.1
$region0: #{vae_forward.1}
  #allocation0 [shape = 'u32[]', space=smem, size = 0x4, offset = 0x4, fixed_abs, tag = 'smem constant byte address 0x4 - core index']
  #allocation1 [shape = 'u32[144,128]{1,0:T(1,128)}', space=vmem, size = 0x12000, scoped, tag = 'internal scratch']
  %s0 = inlined_call_operand.vmem [shape: f32[13,128], index: 0, kind: input, shape index: {}]
  %s1 = inlined_call_operand.vmem [shape: f32[248,64], index: 1, kind: input, shape index: {}]
  %s2 = inlined_call_operand.vmem [shape: f32[248,1], index: 2, kind: input, shape index: {}]
  %s3 = inlined_call_operand.vmem [shape: f32[21,128], index: 3, kind: output, shape index: {}]
  %s4 = sld [smem:[#allocation0]]
  $region22: #{vae_forward.1} parent=0
    _
  %s6 = ssub.s32 1, %s4
  %s7 = scalar_select 0, %s6, %s4
  // Predicated region
  $region2: #{vae_forward.1} parent=0 // pred_check
    _
  $region3: #{vae_forward.1} parent=0 // pred_check_branch
    %9 = sbr.rel (0) target = $region5
  $region4: #{vae_forward.1} parent=0 // pred_region
    _
  $region5: #{vae_forward.1} parent=0 // pred_fallthru
    _
  // Predicated region
  $region6: #{vae_forward.1} parent=0 // pred_check
    _
  $region7: #{vae_forward.1} parent=0 // pred_check_branch
    %11 = sbr.rel (0) target = $region9
  $region8: #{vae_forward.1} parent=0 // pred_region
    _
  $region9: #{vae_forward.1} parent=0 // pred_fallthru
    _
  // Predicated region
  $region10: #{vae_forward.1} parent=0 // pred_check
    _
  $region11: #{vae_forward.1} parent=0 // pred_check_branch
    %13 = sbr.rel (0) target = $region13
  $region12: #{vae_forward.1} parent=0 // pred_region
    _
  $region13: #{vae_forward.1} parent=0 // pred_fallthru
    _
  %v14 = vld [vmem:[%s0] sm:$0xff]
  %v15 = vld [vmem:[%s0 + $0x8] sm:$0x1f]
  %v16 = vld [vmem:[%s1] sm:$0xff]
  %v17 = vld [vmem:[%s1 + $0x8] sm:$0xff]
  %v18 = vld [vmem:[%s1 + $0x10] sm:$0xff]
  %v19 = vld [vmem:[%s1 + $0x18] sm:$0xff]
  %v20 = vld [vmem:[%s1 + $0x20] sm:$0xff]
  %v21 = vld [vmem:[%s1 + $0x28] sm:$0xff]
  %v22 = vld [vmem:[%s1 + $0x30] sm:$0xff]
  %v23 = vld [vmem:[%s1 + $0x38] sm:$0xff]
  %v24 = vld [vmem:[%s2] sm:$0xff]
  %v25 = vld [vmem:[%s2 + $0x8] sm:$0xff]
  %v26 = vld [vmem:[%s2 + $0x10] sm:$0xff]
  %v27 = vld [vmem:[%s2 + $0x18] sm:$0xff]
  %v28 = vld [vmem:[%s2 + $0x20] sm:$0xff]
  %v29 = vld [vmem:[%s2 + $0x28] sm:$0xff]
  %v30 = vld [vmem:[%s2 + $0x30] sm:$0xff]
  %v31 = vld [vmem:[%s2 + $0x38] sm:$0xff]
  %33 = vset.pattern.permute.xlu0 0
  %34 = vperm.xlu0 %33, %v24
  %v35 = vpop.permute.xlu0 %34
  %38 = vset.pattern.permute.xlu0 0
  %39 = vperm.xlu0 %38, %v25
  %v40 = vpop.permute.xlu0 %39
  %43 = vset.pattern.permute.xlu0 0
  %44 = vperm.xlu0 %43, %v26
  %v45 = vpop.permute.xlu0 %44
  %48 = vset.pattern.permute.xlu0 0
  %49 = vperm.xlu0 %48, %v27
  %v50 = vpop.permute.xlu0 %49
  %53 = vset.pattern.permute.xlu0 0
  %54 = vperm.xlu0 %53, %v28
  %v55 = vpop.permute.xlu0 %54
  %58 = vset.pattern.permute.xlu0 0
  %59 = vperm.xlu0 %58, %v29
  %v60 = vpop.permute.xlu0 %59
  %63 = vset.pattern.permute.xlu0 0
  %64 = vperm.xlu0 %63, %v30
  %v65 = vpop.permute.xlu0 %64
  %68 = vset.pattern.permute.xlu0 0
  %69 = vperm.xlu0 %68, %v31
  %v70 = vpop.permute.xlu0 %69
  %vm72 = vcmask 39936
  %v74 = vsel %vm72, %v16, 0
  %v77 = vsel %vm72, %v17, 0
  %v80 = vsel %vm72, %v18, 0
  %v83 = vsel %vm72, %v19, 0
  %v86 = vsel %vm72, %v20, 0
  %v89 = vsel %vm72, %v21, 0
  %v92 = vsel %vm72, %v22, 0
  %v95 = vsel %vm72, %v23, 0
  %vm97 = vcmask 1044480
  %v99 = vsel %vm97, %v15, 0
  %101 = vmatprep.subr.mxu0 0.0
  %102 = vmatpush1.msra.mxu0 %v99
  %103 = vmatprep.subr.mxu0 0.0
  %104 = vmatpush1.msra.mxu0 0.0
  %105 = vmatprep.subr.mxu0 0.0
  %106 = vmatpush1.msra.mxu0 0.0
  %107 = vmatprep.subr.mxu0 0.0
  %108 = vmatpush1.msra.mxu0 0.0
  %109 = vmatprep.subr.mxu0 0.0
  %110 = vmatpush1.msra.mxu0 0.0
  %111 = vmatprep.subr.mxu0 0.0
  %112 = vmatpush1.msra.mxu0 0.0
  %113 = vmatprep.subr.mxu0 0.0
  %114 = vmatpush1.msra.mxu0 0.0
  %115 = vmatprep.subr.mxu0 0.0
  %116 = vmatpush1.msra.mxu0 0.0
  %117 = vmatprep.subr.mxu0 0.0
  %118 = vmatpush1.msra.mxu0 0.0
  %119 = vmatprep.subr.mxu0 0.0
  %120 = vmatpush1.msra.mxu0 0.0
  %121 = vmatprep.subr.mxu0 0.0
  %122 = vmatpush1.msra.mxu0 0.0
  %123 = vmatprep.subr.mxu0 0.0
  %124 = vmatpush1.msra.mxu0 0.0
  %125 = vmatprep.subr.mxu0 0.0
  %126 = vmatpush1.msra.mxu0 0.0
  %127 = vmatprep.subr.mxu0 0.0
  %128 = vmatpush1.msra.mxu0 0.0
  %129 = vmatprep.subr.mxu0 0.0
  %130 = vmatpush1.msra.mxu0 0.0
  %131 = vmatprep.subr.mxu0 0.0
  %132 = vmatpush1.msra.mxu0 0.0
  %133 = vmatprep.subr.mxu0 0.0
  %134 = vmatpush1.msra.mxu0 0.0
  %135 = vmatprep.subr.mxu0 0.0
  %136 = vmatpush1.msra.mxu0 0.0
  %137 = vmatprep.subr.mxu0 0.0
  %138 = vmatpush1.msra.mxu0 0.0
  %139 = vmatprep.subr.mxu0 0.0
  %140 = vmatpush1.msra.mxu0 0.0
  %141 = vmatprep.subr.mxu0 0.0
  %142 = vmatpush1.msra.mxu0 0.0
  %143 = vmatprep.subr.mxu0 0.0
  %144 = vmatpush1.msra.mxu0 0.0
  %145 = vmatprep.subr.mxu0 0.0
  %146 = vmatpush1.msra.mxu0 0.0
  %147 = vmatprep.subr.mxu0 0.0
  %148 = vmatpush1.msra.mxu0 0.0
  %149 = vmatprep.subr.mxu0 0.0
  %150 = vmatpush1.msra.mxu0 0.0
  %151 = vmatprep.subr.mxu0 0.0
  %152 = vmatpush1.msra.mxu0 0.0
  %153 = vmatprep.subr.mxu0 0.0
  %154 = vmatpush1.msra.mxu0 0.0
  %155 = vmatprep.subr.mxu0 0.0
  %156 = vmatpush1.msra.mxu0 0.0
  %157 = vmatprep.subr.mxu0 0.0
  %158 = vmatpush1.msra.mxu0 0.0
  %159 = vmatprep.subr.mxu0 0.0
  %160 = vmatpush1.msra.mxu0 0.0
  %161 = vmatprep.subr.mxu0 0.0
  %162 = vmatpush1.msra.mxu0 0.0
  %163 = vmatprep.subr.mxu0 0.0
  %164 = vmatpush1.msra.mxu0 0.0
  %165 = vmatprep.mubr.f32.mxu0 0.0
  %166 = vmatmul.mubr.f32.gmra.mrb[0].mxu0 %v74
  %v167 = vpop.f32.mrb[0].mxu0
  %v168 = vadd.f32 %v35, %v167
  %v169 = vpop.f32.mrb[0].mxu0
  %170 = vmatprep.mubr.f32.mxu0 0.0
  %171 = vmatmul.mubr.f32.gmra.mrb[0].mxu0 %v77
  %v172 = vpop.f32.mrb[0].mxu0
  %v173 = vadd.f32 %v40, %v172
  %v174 = vpop.f32.mrb[0].mxu0
  %175 = vmatprep.mubr.f32.mxu0 0.0
  %176 = vmatmul.mubr.f32.gmra.mrb[0].mxu0 %v80
  %v177 = vpop.f32.mrb[0].mxu0
  %v178 = vadd.f32 %v45, %v177
  %v179 = vpop.f32.mrb[0].mxu0
  %180 = vmatprep.mubr.f32.mxu0 0.0
  %181 = vmatmul.mubr.f32.gmra.mrb[0].mxu0 %v83
  %v182 = vpop.f32.mrb[0].mxu0
  %v183 = vadd.f32 %v50, %v182
  %v184 = vpop.f32.mrb[0].mxu0
  %185 = vmatprep.mubr.f32.mxu0 0.0
  %186 = vmatmul.mubr.f32.gmra.mrb[0].mxu0 %v86
  %v187 = vpop.f32.mrb[0].mxu0
  %v188 = vadd.f32 %v55, %v187
  %v189 = vpop.f32.mrb[0].mxu0
  %190 = vmatprep.mubr.f32.mxu0 0.0
  %191 = vmatmul.mubr.f32.gmra.mrb[0].mxu0 %v89
  %v192 = vpop.f32.mrb[0].mxu0
  %v193 = vadd.f32 %v60, %v192
  %v194 = vpop.f32.mrb[0].mxu0
  %195 = vmatprep.mubr.f32.mxu0 0.0
  %196 = vmatmul.mubr.f32.gmra.mrb[0].mxu0 %v92
  %v197 = vpop.f32.mrb[0].mxu0
  %v198 = vadd.f32 %v65, %v197
  %v199 = vpop.f32.mrb[0].mxu0
  %200 = vmatprep.mubr.f32.mxu0 0.0
  %201 = vmatmul.mubr.f32.gmra.mrb[0].mxu0 %v95
  %v202 = vpop.f32.mrb[0].mxu0
  %v203 = vadd.f32 %v70, %v202
  %v204 = vpop.f32.mrb[0].mxu0
  %205 = vdwg.mxu0
  %v206 = vmax.f32 %v168, 0.0
  %v207 = vmax.f32 %v173, 0.0
  %v208 = vmax.f32 %v178, 0.0
  %v209 = vmax.f32 %v183, 0.0
  %v210 = vmax.f32 %v188, 0.0
  %v211 = vmax.f32 %v193, 0.0
  %v212 = vmax.f32 %v198, 0.0
  %v213 = vmax.f32 %v203, 0.0
  %v214 = vld [vmem:[%s1 + $0x40] sm:$0xff]
  %v215 = vld [vmem:[%s1 + $0x48] sm:$0xff]
  %v216 = vld [vmem:[%s1 + $0x50] sm:$0xff]
  %v217 = vld [vmem:[%s1 + $0x58] sm:$0xff]
  %v218 = vld [vmem:[%s2 + $0x40] sm:$0xff]
  %v219 = vld [vmem:[%s2 + $0x48] sm:$0xff]
  %v220 = vld [vmem:[%s2 + $0x50] sm:$0xff]
  %v221 = vld [vmem:[%s2 + $0x58] sm:$0xff]
  %223 = vset.pattern.permute.xlu0 0
  %224 = vperm.xlu0 %223, %v218
  %v225 = vpop.permute.xlu0 %224
  %228 = vset.pattern.permute.xlu0 0
  %229 = vperm.xlu0 %228, %v219
  %v230 = vpop.permute.xlu0 %229
  %233 = vset.pattern.permute.xlu0 0
  %234 = vperm.xlu0 %233, %v220
  %v235 = vpop.permute.xlu0 %234
  %238 = vset.pattern.permute.xlu0 0
  %239 = vperm.xlu0 %238, %v221
  %v240 = vpop.permute.xlu0 %239
  %vm242 = vcmask 523264
  %v244 = vsel %vm242, %v214, 0
  %v247 = vsel %vm242, %v215, 0
  %v250 = vsel %vm242, %v216, 0
  %v253 = vsel %vm242, %v217, 0
  %255 = vmatprep.subr.mxu0 0.0
  %256 = vmatpush1.msra.mxu0 %v206
  %257 = vmatprep.subr.mxu0 0.0
  %258 = vmatpush1.msra.mxu0 %v207
  %259 = vmatprep.subr.mxu0 0.0
  %260 = vmatpush1.msra.mxu0 %v208
  %261 = vmatprep.subr.mxu0 0.0
  %262 = vmatpush1.msra.mxu0 %v209
  %263 = vmatprep.subr.mxu0 0.0
  %264 = vmatpush1.msra.mxu0 %v210
  %265 = vmatprep.subr.mxu0 0.0
  %266 = vmatpush1.msra.mxu0 %v211
  %267 = vmatprep.subr.mxu0 0.0
  %268 = vmatpush1.msra.mxu0 %v212
  %269 = vmatprep.subr.mxu0 0.0
  %270 = vmatpush1.msra.mxu0 %v213
  %271 = vmatprep.subr.mxu0 0.0
  %272 = vmatpush1.msra.mxu0 0.0
  %273 = vmatprep.subr.mxu0 0.0
  %274 = vmatpush1.msra.mxu0 0.0
  %275 = vmatprep.subr.mxu0 0.0
  %276 = vmatpush1.msra.mxu0 0.0
  %277 = vmatprep.subr.mxu0 0.0
  %278 = vmatpush1.msra.mxu0 0.0
  %279 = vmatprep.subr.mxu0 0.0
  %280 = vmatpush1.msra.mxu0 0.0
  %281 = vmatprep.subr.mxu0 0.0
  %282 = vmatpush1.msra.mxu0 0.0
  %283 = vmatprep.subr.mxu0 0.0
  %284 = vmatpush1.msra.mxu0 0.0
  %285 = vmatprep.subr.mxu0 0.0
  %286 = vmatpush1.msra.mxu0 0.0
  %287 = vmatprep.subr.mxu0 0.0
  %288 = vmatpush1.msra.mxu0 0.0
  %289 = vmatprep.subr.mxu0 0.0
  %290 = vmatpush1.msra.mxu0 0.0
  %291 = vmatprep.subr.mxu0 0.0
  %292 = vmatpush1.msra.mxu0 0.0
  %293 = vmatprep.subr.mxu0 0.0
  %294 = vmatpush1.msra.mxu0 0.0
  %295 = vmatprep.subr.mxu0 0.0
  %296 = vmatpush1.msra.mxu0 0.0
  %297 = vmatprep.subr.mxu0 0.0
  %298 = vmatpush1.msra.mxu0 0.0
  %299 = vmatprep.subr.mxu0 0.0
  %300 = vmatpush1.msra.mxu0 0.0
  %301 = vmatprep.subr.mxu0 0.0
  %302 = vmatpush1.msra.mxu0 0.0
  %303 = vmatprep.subr.mxu0 0.0
  %304 = vmatpush1.msra.mxu0 0.0
  %305 = vmatprep.subr.mxu0 0.0
  %306 = vmatpush1.msra.mxu0 0.0
  %307 = vmatprep.subr.mxu0 0.0
  %308 = vmatpush1.msra.mxu0 0.0
  %309 = vmatprep.subr.mxu0 0.0
  %310 = vmatpush1.msra.mxu0 0.0
  %311 = vmatprep.subr.mxu0 0.0
  %312 = vmatpush1.msra.mxu0 0.0
  %313 = vmatprep.subr.mxu0 0.0
  %314 = vmatpush1.msra.mxu0 0.0
  %315 = vmatprep.subr.mxu0 0.0
  %316 = vmatpush1.msra.mxu0 0.0
  %317 = vmatprep.subr.mxu0 0.0
  %318 = vmatpush1.msra.mxu0 0.0
  %319 = vmatprep.mubr.f32.mxu0 0.0
  %320 = vmatmul.mubr.f32.gmra.mrb[0].mxu0 %v244
  %v321 = vpop.f32.mrb[0].mxu0
  %v322 = vadd.f32 %v225, %v321
  %v323 = vpop.f32.mrb[0].mxu0
  %324 = vmatprep.mubr.f32.mxu0 0.0
  %325 = vmatmul.mubr.f32.gmra.mrb[0].mxu0 %v247
  %v326 = vpop.f32.mrb[0].mxu0
  %v327 = vadd.f32 %v230, %v326
  %v328 = vpop.f32.mrb[0].mxu0
  %329 = vmatprep.mubr.f32.mxu0 0.0
  %330 = vmatmul.mubr.f32.gmra.mrb[0].mxu0 %v250
  %v331 = vpop.f32.mrb[0].mxu0
  %v332 = vadd.f32 %v235, %v331
  %v333 = vpop.f32.mrb[0].mxu0
  %334 = vmatprep.mubr.f32.mxu0 0.0
  %335 = vmatmul.mubr.f32.gmra.mrb[0].mxu0 %v253
  %v336 = vpop.f32.mrb[0].mxu0
  %v337 = vadd.f32 %v240, %v336
  %v338 = vpop.f32.mrb[0].mxu0
  %339 = vdwg.mxu0
  %v340 = vmax.f32 %v322, 0.0
  %v341 = vmax.f32 %v327, 0.0
  %v342 = vmax.f32 %v332, 0.0
  %v343 = vmax.f32 %v337, 0.0
  %v344 = vld [vmem:[%s1 + $0x60] sm:$0xff]
  %v345 = vld [vmem:[%s1 + $0x68] sm:$0xff]
  %v346 = vld [vmem:[%s2 + $0x60] sm:$0xff]
  %v347 = vld [vmem:[%s2 + $0x68] sm:$0xff]
  %349 = vset.pattern.permute.xlu0 0
  %350 = vperm.xlu0 %349, %v346
  %v351 = vpop.permute.xlu0 %350
  %354 = vset.pattern.permute.xlu0 0
  %355 = vperm.xlu0 %354, %v347
  %v356 = vpop.permute.xlu0 %355
  %vm358 = vcmask 261120
  %v360 = vsel %vm358, %v344, 0
  %v363 = vsel %vm358, %v345, 0
  %365 = vmatprep.subr.mxu0 0.0
  %366 = vmatpush1.msra.mxu0 %v340
  %367 = vmatprep.subr.mxu0 0.0
  %368 = vmatpush1.msra.mxu0 %v341
  %369 = vmatprep.subr.mxu0 0.0
  %370 = vmatpush1.msra.mxu0 %v342
  %371 = vmatprep.subr.mxu0 0.0
  %372 = vmatpush1.msra.mxu0 %v343
  %373 = vmatprep.subr.mxu0 0.0
  %374 = vmatpush1.msra.mxu0 0.0
  %375 = vmatprep.subr.mxu0 0.0
  %376 = vmatpush1.msra.mxu0 0.0
  %377 = vmatprep.subr.mxu0 0.0
  %378 = vmatpush1.msra.mxu0 0.0
  %379 = vmatprep.subr.mxu0 0.0
  %380 = vmatpush1.msra.mxu0 0.0
  %381 = vmatprep.subr.mxu0 0.0
  %382 = vmatpush1.msra.mxu0 0.0
  %383 = vmatprep.subr.mxu0 0.0
  %384 = vmatpush1.msra.mxu0 0.0
  %385 = vmatprep.subr.mxu0 0.0
  %386 = vmatpush1.msra.mxu0 0.0
  %387 = vmatprep.subr.mxu0 0.0
  %388 = vmatpush1.msra.mxu0 0.0
  %389 = vmatprep.subr.mxu0 0.0
  %390 = vmatpush1.msra.mxu0 0.0
  %391 = vmatprep.subr.mxu0 0.0
  %392 = vmatpush1.msra.mxu0 0.0
  %393 = vmatprep.subr.mxu0 0.0
  %394 = vmatpush1.msra.mxu0 0.0
  %395 = vmatprep.subr.mxu0 0.0
  %396 = vmatpush1.msra.mxu0 0.0
  %397 = vmatprep.subr.mxu0 0.0
  %398 = vmatpush1.msra.mxu0 0.0
  %399 = vmatprep.subr.mxu0 0.0
  %400 = vmatpush1.msra.mxu0 0.0
  %401 = vmatprep.subr.mxu0 0.0
  %402 = vmatpush1.msra.mxu0 0.0
  %403 = vmatprep.subr.mxu0 0.0
  %404 = vmatpush1.msra.mxu0 0.0
  %405 = vmatprep.subr.mxu0 0.0
  %406 = vmatpush1.msra.mxu0 0.0
  %407 = vmatprep.subr.mxu0 0.0
  %408 = vmatpush1.msra.mxu0 0.0
  %409 = vmatprep.subr.mxu0 0.0
  %410 = vmatpush1.msra.mxu0 0.0
  %411 = vmatprep.subr.mxu0 0.0
  %412 = vmatpush1.msra.mxu0 0.0
  %413 = vmatprep.subr.mxu0 0.0
  %414 = vmatpush1.msra.mxu0 0.0
  %415 = vmatprep.subr.mxu0 0.0
  %416 = vmatpush1.msra.mxu0 0.0
  %417 = vmatprep.subr.mxu0 0.0
  %418 = vmatpush1.msra.mxu0 0.0
  %419 = vmatprep.subr.mxu0 0.0
  %420 = vmatpush1.msra.mxu0 0.0
  %421 = vmatprep.subr.mxu0 0.0
  %422 = vmatpush1.msra.mxu0 0.0
  %423 = vmatprep.subr.mxu0 0.0
  %424 = vmatpush1.msra.mxu0 0.0
  %425 = vmatprep.subr.mxu0 0.0
  %426 = vmatpush1.msra.mxu0 0.0
  %427 = vmatprep.subr.mxu0 0.0
  %428 = vmatpush1.msra.mxu0 0.0
  %429 = vmatprep.mubr.f32.mxu0 0.0
  %430 = vmatmul.mubr.f32.gmra.mrb[0].mxu0 %v360
  %v431 = vpop.f32.mrb[0].mxu0
  %v432 = vadd.f32 %v351, %v431
  %v433 = vpop.f32.mrb[0].mxu0
  %434 = vmatprep.mubr.f32.mxu0 0.0
  %435 = vmatmul.mubr.f32.gmra.mrb[0].mxu0 %v363
  %v436 = vpop.f32.mrb[0].mxu0
  %v437 = vadd.f32 %v356, %v436
  %v438 = vpop.f32.mrb[0].mxu0
  %439 = vdwg.mxu0
  %v440 = vmax.f32 %v432, 0.0
  %v441 = vmax.f32 %v437, 0.0
  %v442 = vld [vmem:[%s1 + $0x70] sm:$0xff]
  %v443 = vld [vmem:[%s1 + $0x78] sm:$0xff]
  %v444 = vld [vmem:[%s2 + $0x70] sm:$0xff]
  %v445 = vld [vmem:[%s2 + $0x78] sm:$0xff]
  %447 = vset.pattern.permute.xlu0 0
  %448 = vperm.xlu0 %447, %v444
  %v449 = vpop.permute.xlu0 %448
  %452 = vset.pattern.permute.xlu0 0
  %453 = vperm.xlu0 %452, %v445
  %v454 = vpop.permute.xlu0 %453
  %vm456 = vcmask 130048
  %v458 = vsel %vm456, %v442, 0
  %v461 = vsel %vm456, %v443, 0
  %463 = vmatprep.subr.mxu0 0.0
  %464 = vmatpush1.msra.mxu0 %v440
  %465 = vmatprep.subr.mxu0 0.0
  %466 = vmatpush1.msra.mxu0 %v441
  %467 = vmatprep.subr.mxu0 0.0
  %468 = vmatpush1.msra.mxu0 0.0
  %469 = vmatprep.subr.mxu0 0.0
  %470 = vmatpush1.msra.mxu0 0.0
  %471 = vmatprep.subr.mxu0 0.0
  %472 = vmatpush1.msra.mxu0 0.0
  %473 = vmatprep.subr.mxu0 0.0
  %474 = vmatpush1.msra.mxu0 0.0
  %475 = vmatprep.subr.mxu0 0.0
  %476 = vmatpush1.msra.mxu0 0.0
  %477 = vmatprep.subr.mxu0 0.0
  %478 = vmatpush1.msra.mxu0 0.0
  %479 = vmatprep.subr.mxu0 0.0
  %480 = vmatpush1.msra.mxu0 0.0
  %481 = vmatprep.subr.mxu0 0.0
  %482 = vmatpush1.msra.mxu0 0.0
  %483 = vmatprep.subr.mxu0 0.0
  %484 = vmatpush1.msra.mxu0 0.0
  %485 = vmatprep.subr.mxu0 0.0
  %486 = vmatpush1.msra.mxu0 0.0
  %487 = vmatprep.subr.mxu0 0.0
  %488 = vmatpush1.msra.mxu0 0.0
  %489 = vmatprep.subr.mxu0 0.0
  %490 = vmatpush1.msra.mxu0 0.0
  %491 = vmatprep.subr.mxu0 0.0
  %492 = vmatpush1.msra.mxu0 0.0
  %493 = vmatprep.subr.mxu0 0.0
  %494 = vmatpush1.msra.mxu0 0.0
  %495 = vmatprep.subr.mxu0 0.0
  %496 = vmatpush1.msra.mxu0 0.0
  %497 = vmatprep.subr.mxu0 0.0
  %498 = vmatpush1.msra.mxu0 0.0
  %499 = vmatprep.subr.mxu0 0.0
  %500 = vmatpush1.msra.mxu0 0.0
  %501 = vmatprep.subr.mxu0 0.0
  %502 = vmatpush1.msra.mxu0 0.0
  %503 = vmatprep.subr.mxu0 0.0
  %504 = vmatpush1.msra.mxu0 0.0
  %505 = vmatprep.subr.mxu0 0.0
  %506 = vmatpush1.msra.mxu0 0.0
  %507 = vmatprep.subr.mxu0 0.0
  %508 = vmatpush1.msra.mxu0 0.0
  %509 = vmatprep.subr.mxu0 0.0
  %510 = vmatpush1.msra.mxu0 0.0
  %511 = vmatprep.subr.mxu0 0.0
  %512 = vmatpush1.msra.mxu0 0.0
  %513 = vmatprep.subr.mxu0 0.0
  %514 = vmatpush1.msra.mxu0 0.0
  %515 = vmatprep.subr.mxu0 0.0
  %516 = vmatpush1.msra.mxu0 0.0
  %517 = vmatprep.subr.mxu0 0.0
  %518 = vmatpush1.msra.mxu0 0.0
  %519 = vmatprep.subr.mxu0 0.0
  %520 = vmatpush1.msra.mxu0 0.0
  %521 = vmatprep.subr.mxu0 0.0
  %522 = vmatpush1.msra.mxu0 0.0
  %523 = vmatprep.subr.mxu0 0.0
  %524 = vmatpush1.msra.mxu0 0.0
  %525 = vmatprep.subr.mxu0 0.0
  %526 = vmatpush1.msra.mxu0 0.0
  %527 = vmatprep.mubr.f32.mxu0 0.0
  %528 = vmatmul.mubr.f32.gmra.mrb[0].mxu0 %v458
  %v529 = vpop.f32.mrb[0].mxu0
  %v530 = vadd.f32 %v449, %v529
  %v531 = vpop.f32.mrb[0].mxu0
  %532 = vmatprep.mubr.f32.mxu0 0.0
  %533 = vmatmul.mubr.f32.gmra.mrb[0].mxu0 %v461
  %v534 = vpop.f32.mrb[0].mxu0
  %v535 = vadd.f32 %v454, %v534
  %v536 = vpop.f32.mrb[0].mxu0
  %537 = vdwg.mxu0
  %v538 = vmul.f32 %v535, 0.5
  %v539 = vmul.f32 %v538, 1.442695
  %v540 = vpow.pop %v539
  %v541 = vmul.f32 %v14, %v540
  %v542 = vadd.f32 %v530, %v541
  %v543 = vld [vmem:[%s1 + $0x80] sm:$0xff]
  %v544 = vld [vmem:[%s1 + $0x88] sm:$0xff]
  %v545 = vld [vmem:[%s2 + $0x80] sm:$0xff]
  %v546 = vld [vmem:[%s2 + $0x88] sm:$0xff]
  %548 = vset.pattern.permute.xlu0 0
  %549 = vperm.xlu0 %548, %v545
  %v550 = vpop.permute.xlu0 %549
  %553 = vset.pattern.permute.xlu0 0
  %554 = vperm.xlu0 %553, %v546
  %v555 = vpop.permute.xlu0 %554
  %vm557 = vcmask 64512
  %v559 = vsel %vm557, %v543, 0
  %v562 = vsel %vm557, %v544, 0
  %564 = vmatprep.subr.mxu0 0.0
  %565 = vmatpush1.msra.mxu0 %v542
  %566 = vmatprep.subr.mxu0 0.0
  %567 = vmatpush1.msra.mxu0 0.0
  %568 = vmatprep.subr.mxu0 0.0
  %569 = vmatpush1.msra.mxu0 0.0
  %570 = vmatprep.subr.mxu0 0.0
  %571 = vmatpush1.msra.mxu0 0.0
  %572 = vmatprep.subr.mxu0 0.0
  %573 = vmatpush1.msra.mxu0 0.0
  %574 = vmatprep.subr.mxu0 0.0
  %575 = vmatpush1.msra.mxu0 0.0
  %576 = vmatprep.subr.mxu0 0.0
  %577 = vmatpush1.msra.mxu0 0.0
  %578 = vmatprep.subr.mxu0 0.0
  %579 = vmatpush1.msra.mxu0 0.0
  %580 = vmatprep.subr.mxu0 0.0
  %581 = vmatpush1.msra.mxu0 0.0
  %582 = vmatprep.subr.mxu0 0.0
  %583 = vmatpush1.msra.mxu0 0.0
  %584 = vmatprep.subr.mxu0 0.0
  %585 = vmatpush1.msra.mxu0 0.0
  %586 = vmatprep.subr.mxu0 0.0
  %587 = vmatpush1.msra.mxu0 0.0
  %588 = vmatprep.subr.mxu0 0.0
  %589 = vmatpush1.msra.mxu0 0.0
  %590 = vmatprep.subr.mxu0 0.0
  %591 = vmatpush1.msra.mxu0 0.0
  %592 = vmatprep.subr.mxu0 0.0
  %593 = vmatpush1.msra.mxu0 0.0
  %594 = vmatprep.subr.mxu0 0.0
  %595 = vmatpush1.msra.mxu0 0.0
  %596 = vmatprep.subr.mxu0 0.0
  %597 = vmatpush1.msra.mxu0 0.0
  %598 = vmatprep.subr.mxu0 0.0
  %599 = vmatpush1.msra.mxu0 0.0
  %600 = vmatprep.subr.mxu0 0.0
  %601 = vmatpush1.msra.mxu0 0.0
  %602 = vmatprep.subr.mxu0 0.0
  %603 = vmatpush1.msra.mxu0 0.0
  %604 = vmatprep.subr.mxu0 0.0
  %605 = vmatpush1.msra.mxu0 0.0
  %606 = vmatprep.subr.mxu0 0.0
  %607 = vmatpush1.msra.mxu0 0.0
  %608 = vmatprep.subr.mxu0 0.0
  %609 = vmatpush1.msra.mxu0 0.0
  %610 = vmatprep.subr.mxu0 0.0
  %611 = vmatpush1.msra.mxu0 0.0
  %612 = vmatprep.subr.mxu0 0.0
  %613 = vmatpush1.msra.mxu0 0.0
  %614 = vmatprep.subr.mxu0 0.0
  %615 = vmatpush1.msra.mxu0 0.0
  %616 = vmatprep.subr.mxu0 0.0
  %617 = vmatpush1.msra.mxu0 0.0
  %618 = vmatprep.subr.mxu0 0.0
  %619 = vmatpush1.msra.mxu0 0.0
  %620 = vmatprep.subr.mxu0 0.0
  %621 = vmatpush1.msra.mxu0 0.0
  %622 = vmatprep.subr.mxu0 0.0
  %623 = vmatpush1.msra.mxu0 0.0
  %624 = vmatprep.subr.mxu0 0.0
  %625 = vmatpush1.msra.mxu0 0.0
  %626 = vmatprep.subr.mxu0 0.0
  %627 = vmatpush1.msra.mxu0 0.0
  %628 = vmatprep.mubr.f32.mxu0 0.0
  %629 = vmatmul.mubr.f32.gmra.mrb[0].mxu0 %v559
  %v630 = vpop.f32.mrb[0].mxu0
  %v631 = vadd.f32 %v550, %v630
  %v632 = vpop.f32.mrb[0].mxu0
  %633 = vmatprep.mubr.f32.mxu0 0.0
  %634 = vmatmul.mubr.f32.gmra.mrb[0].mxu0 %v562
  %v635 = vpop.f32.mrb[0].mxu0
  %v636 = vadd.f32 %v555, %v635
  %v637 = vpop.f32.mrb[0].mxu0
  %638 = vdwg.mxu0
  %v639 = vmax.f32 %v631, 0.0
  %v640 = vmax.f32 %v636, 0.0
  %v641 = vld [vmem:[%s1 + $0x90] sm:$0xff]
  %v642 = vld [vmem:[%s1 + $0x98] sm:$0xff]
  %v643 = vld [vmem:[%s1 + $0xa0] sm:$0xff]
  %v644 = vld [vmem:[%s1 + $0xa8] sm:$0xff]
  %v645 = vld [vmem:[%s2 + $0x90] sm:$0xff]
  %v646 = vld [vmem:[%s2 + $0x98] sm:$0xff]
  %v647 = vld [vmem:[%s2 + $0xa0] sm:$0xff]
  %v648 = vld [vmem:[%s2 + $0xa8] sm:$0xff]
  %650 = vset.pattern.permute.xlu0 0
  %651 = vperm.xlu0 %650, %v645
  %v652 = vpop.permute.xlu0 %651
  %655 = vset.pattern.permute.xlu0 0
  %656 = vperm.xlu0 %655, %v646
  %v657 = vpop.permute.xlu0 %656
  %660 = vset.pattern.permute.xlu0 0
  %661 = vperm.xlu0 %660, %v647
  %v662 = vpop.permute.xlu0 %661
  %665 = vset.pattern.permute.xlu0 0
  %666 = vperm.xlu0 %665, %v648
  %v667 = vpop.permute.xlu0 %666
  %v670 = vsel %vm456, %v641, 0
  %v673 = vsel %vm456, %v642, 0
  %v676 = vsel %vm456, %v643, 0
  %v679 = vsel %vm456, %v644, 0
  %681 = vmatprep.subr.mxu0 0.0
  %682 = vmatpush1.msra.mxu0 %v639
  %683 = vmatprep.subr.mxu0 0.0
  %684 = vmatpush1.msra.mxu0 %v640
  %685 = vmatprep.subr.mxu0 0.0
  %686 = vmatpush1.msra.mxu0 0.0
  %687 = vmatprep.subr.mxu0 0.0
  %688 = vmatpush1.msra.mxu0 0.0
  %689 = vmatprep.subr.mxu0 0.0
  %690 = vmatpush1.msra.mxu0 0.0
  %691 = vmatprep.subr.mxu0 0.0
  %692 = vmatpush1.msra.mxu0 0.0
  %693 = vmatprep.subr.mxu0 0.0
  %694 = vmatpush1.msra.mxu0 0.0
  %695 = vmatprep.subr.mxu0 0.0
  %696 = vmatpush1.msra.mxu0 0.0
  %697 = vmatprep.subr.mxu0 0.0
  %698 = vmatpush1.msra.mxu0 0.0
  %699 = vmatprep.subr.mxu0 0.0
  %700 = vmatpush1.msra.mxu0 0.0
  %701 = vmatprep.subr.mxu0 0.0
  %702 = vmatpush1.msra.mxu0 0.0
  %703 = vmatprep.subr.mxu0 0.0
  %704 = vmatpush1.msra.mxu0 0.0
  %705 = vmatprep.subr.mxu0 0.0
  %706 = vmatpush1.msra.mxu0 0.0
  %707 = vmatprep.subr.mxu0 0.0
  %708 = vmatpush1.msra.mxu0 0.0
  %709 = vmatprep.subr.mxu0 0.0
  %710 = vmatpush1.msra.mxu0 0.0
  %711 = vmatprep.subr.mxu0 0.0
  %712 = vmatpush1.msra.mxu0 0.0
  %713 = vmatprep.subr.mxu0 0.0
  %714 = vmatpush1.msra.mxu0 0.0
  %715 = vmatprep.subr.mxu0 0.0
  %716 = vmatpush1.msra.mxu0 0.0
  %717 = vmatprep.subr.mxu0 0.0
  %718 = vmatpush1.msra.mxu0 0.0
  %719 = vmatprep.subr.mxu0 0.0
  %720 = vmatpush1.msra.mxu0 0.0
  %721 = vmatprep.subr.mxu0 0.0
  %722 = vmatpush1.msra.mxu0 0.0
  %723 = vmatprep.subr.mxu0 0.0
  %724 = vmatpush1.msra.mxu0 0.0
  %725 = vmatprep.subr.mxu0 0.0
  %726 = vmatpush1.msra.mxu0 0.0
  %727 = vmatprep.subr.mxu0 0.0
  %728 = vmatpush1.msra.mxu0 0.0
  %729 = vmatprep.subr.mxu0 0.0
  %730 = vmatpush1.msra.mxu0 0.0
  %731 = vmatprep.subr.mxu0 0.0
  %732 = vmatpush1.msra.mxu0 0.0
  %733 = vmatprep.subr.mxu0 0.0
  %734 = vmatpush1.msra.mxu0 0.0
  %735 = vmatprep.subr.mxu0 0.0
  %736 = vmatpush1.msra.mxu0 0.0
  %737 = vmatprep.subr.mxu0 0.0
  %738 = vmatpush1.msra.mxu0 0.0
  %739 = vmatprep.subr.mxu0 0.0
  %740 = vmatpush1.msra.mxu0 0.0
  %741 = vmatprep.subr.mxu0 0.0
  %742 = vmatpush1.msra.mxu0 0.0
  %743 = vmatprep.subr.mxu0 0.0
  %744 = vmatpush1.msra.mxu0 0.0
  %745 = vmatprep.mubr.f32.mxu0 0.0
  %746 = vmatmul.mubr.f32.gmra.mrb[0].mxu0 %v670
  %v747 = vpop.f32.mrb[0].mxu0
  %v748 = vadd.f32 %v652, %v747
  %v749 = vpop.f32.mrb[0].mxu0
  %750 = vmatprep.mubr.f32.mxu0 0.0
  %751 = vmatmul.mubr.f32.gmra.mrb[0].mxu0 %v673
  %v752 = vpop.f32.mrb[0].mxu0
  %v753 = vadd.f32 %v657, %v752
  %v754 = vpop.f32.mrb[0].mxu0
  %755 = vmatprep.mubr.f32.mxu0 0.0
  %756 = vmatmul.mubr.f32.gmra.mrb[0].mxu0 %v676
  %v757 = vpop.f32.mrb[0].mxu0
  %v758 = vadd.f32 %v662, %v757
  %v759 = vpop.f32.mrb[0].mxu0
  %760 = vmatprep.mubr.f32.mxu0 0.0
  %761 = vmatmul.mubr.f32.gmra.mrb[0].mxu0 %v679
  %v762 = vpop.f32.mrb[0].mxu0
  %v763 = vadd.f32 %v667, %v762
  %v764 = vpop.f32.mrb[0].mxu0
  %765 = vdwg.mxu0
  %v766 = vmax.f32 %v748, 0.0
  %v767 = vmax.f32 %v753, 0.0
  %v768 = vmax.f32 %v758, 0.0
  %v769 = vmax.f32 %v763, 0.0
  %v770 = vld [vmem:[%s1 + $0xb0] sm:$0xff]
  %v771 = vld [vmem:[%s1 + $0xb8] sm:$0xff]
  %v772 = vld [vmem:[%s1 + $0xc0] sm:$0xff]
  %v773 = vld [vmem:[%s1 + $0xc8] sm:$0xff]
  %v774 = vld [vmem:[%s1 + $0xd0] sm:$0xff]
  %v775 = vld [vmem:[%s1 + $0xd8] sm:$0xff]
  %v776 = vld [vmem:[%s1 + $0xe0] sm:$0xff]
  %v777 = vld [vmem:[%s1 + $0xe8] sm:$0xff]
  %v778 = vld [vmem:[%s2 + $0xb0] sm:$0xff]
  %v779 = vld [vmem:[%s2 + $0xb8] sm:$0xff]
  %v780 = vld [vmem:[%s2 + $0xc0] sm:$0xff]
  %v781 = vld [vmem:[%s2 + $0xc8] sm:$0xff]
  %v782 = vld [vmem:[%s2 + $0xd0] sm:$0xff]
  %v783 = vld [vmem:[%s2 + $0xd8] sm:$0xff]
  %v784 = vld [vmem:[%s2 + $0xe0] sm:$0xff]
  %v785 = vld [vmem:[%s2 + $0xe8] sm:$0xff]
  %787 = vset.pattern.permute.xlu0 0
  %788 = vperm.xlu0 %787, %v778
  %v789 = vpop.permute.xlu0 %788
  %792 = vset.pattern.permute.xlu0 0
  %793 = vperm.xlu0 %792, %v779
  %v794 = vpop.permute.xlu0 %793
  %797 = vset.pattern.permute.xlu0 0
  %798 = vperm.xlu0 %797, %v780
  %v799 = vpop.permute.xlu0 %798
  %802 = vset.pattern.permute.xlu0 0
  %803 = vperm.xlu0 %802, %v781
  %v804 = vpop.permute.xlu0 %803
  %807 = vset.pattern.permute.xlu0 0
  %808 = vperm.xlu0 %807, %v782
  %v809 = vpop.permute.xlu0 %808
  %812 = vset.pattern.permute.xlu0 0
  %813 = vperm.xlu0 %812, %v783
  %v814 = vpop.permute.xlu0 %813
  %817 = vset.pattern.permute.xlu0 0
  %818 = vperm.xlu0 %817, %v784
  %v819 = vpop.permute.xlu0 %818
  %822 = vset.pattern.permute.xlu0 0
  %823 = vperm.xlu0 %822, %v785
  %v824 = vpop.permute.xlu0 %823
  %v827 = vsel %vm358, %v770, 0
  %v830 = vsel %vm358, %v771, 0
  %v833 = vsel %vm358, %v772, 0
  %v836 = vsel %vm358, %v773, 0
  %v839 = vsel %vm358, %v774, 0
  %v842 = vsel %vm358, %v775, 0
  %v845 = vsel %vm358, %v776, 0
  %v848 = vsel %vm358, %v777, 0
  %850 = vmatprep.subr.mxu0 0.0
  %851 = vmatpush1.msra.mxu0 %v766
  %852 = vmatprep.subr.mxu0 0.0
  %853 = vmatpush1.msra.mxu0 %v767
  %854 = vmatprep.subr.mxu0 0.0
  %855 = vmatpush1.msra.mxu0 %v768
  %856 = vmatprep.subr.mxu0 0.0
  %857 = vmatpush1.msra.mxu0 %v769
  %858 = vmatprep.subr.mxu0 0.0
  %859 = vmatpush1.msra.mxu0 0.0
  %860 = vmatprep.subr.mxu0 0.0
  %861 = vmatpush1.msra.mxu0 0.0
  %862 = vmatprep.subr.mxu0 0.0
  %863 = vmatpush1.msra.mxu0 0.0
  %864 = vmatprep.subr.mxu0 0.0
  %865 = vmatpush1.msra.mxu0 0.0
  %866 = vmatprep.subr.mxu0 0.0
  %867 = vmatpush1.msra.mxu0 0.0
  %868 = vmatprep.subr.mxu0 0.0
  %869 = vmatpush1.msra.mxu0 0.0
  %870 = vmatprep.subr.mxu0 0.0
  %871 = vmatpush1.msra.mxu0 0.0
  %872 = vmatprep.subr.mxu0 0.0
  %873 = vmatpush1.msra.mxu0 0.0
  %874 = vmatprep.subr.mxu0 0.0
  %875 = vmatpush1.msra.mxu0 0.0
  %876 = vmatprep.subr.mxu0 0.0
  %877 = vmatpush1.msra.mxu0 0.0
  %878 = vmatprep.subr.mxu0 0.0
  %879 = vmatpush1.msra.mxu0 0.0
  %880 = vmatprep.subr.mxu0 0.0
  %881 = vmatpush1.msra.mxu0 0.0
  %882 = vmatprep.subr.mxu0 0.0
  %883 = vmatpush1.msra.mxu0 0.0
  %884 = vmatprep.subr.mxu0 0.0
  %885 = vmatpush1.msra.mxu0 0.0
  %886 = vmatprep.subr.mxu0 0.0
  %887 = vmatpush1.msra.mxu0 0.0
  %888 = vmatprep.subr.mxu0 0.0
  %889 = vmatpush1.msra.mxu0 0.0
  %890 = vmatprep.subr.mxu0 0.0
  %891 = vmatpush1.msra.mxu0 0.0
  %892 = vmatprep.subr.mxu0 0.0
  %893 = vmatpush1.msra.mxu0 0.0
  %894 = vmatprep.subr.mxu0 0.0
  %895 = vmatpush1.msra.mxu0 0.0
  %896 = vmatprep.subr.mxu0 0.0
  %897 = vmatpush1.msra.mxu0 0.0
  %898 = vmatprep.subr.mxu0 0.0
  %899 = vmatpush1.msra.mxu0 0.0
  %900 = vmatprep.subr.mxu0 0.0
  %901 = vmatpush1.msra.mxu0 0.0
  %902 = vmatprep.subr.mxu0 0.0
  %903 = vmatpush1.msra.mxu0 0.0
  %904 = vmatprep.subr.mxu0 0.0
  %905 = vmatpush1.msra.mxu0 0.0
  %906 = vmatprep.subr.mxu0 0.0
  %907 = vmatpush1.msra.mxu0 0.0
  %908 = vmatprep.subr.mxu0 0.0
  %909 = vmatpush1.msra.mxu0 0.0
  %910 = vmatprep.subr.mxu0 0.0
  %911 = vmatpush1.msra.mxu0 0.0
  %912 = vmatprep.subr.mxu0 0.0
  %913 = vmatpush1.msra.mxu0 0.0
  %914 = vmatprep.mubr.f32.mxu0 0.0
  %915 = vmatmul.mubr.f32.gmra.mrb[0].mxu0 %v827
  %v916 = vpop.f32.mrb[0].mxu0
  %v917 = vadd.f32 %v789, %v916
  %v918 = vpop.f32.mrb[0].mxu0
  %919 = vmatprep.mubr.f32.mxu0 0.0
  %920 = vmatmul.mubr.f32.gmra.mrb[0].mxu0 %v830
  %v921 = vpop.f32.mrb[0].mxu0
  %v922 = vadd.f32 %v794, %v921
  %v923 = vpop.f32.mrb[0].mxu0
  %924 = vmatprep.mubr.f32.mxu0 0.0
  %925 = vmatmul.mubr.f32.gmra.mrb[0].mxu0 %v833
  %v926 = vpop.f32.mrb[0].mxu0
  %v927 = vadd.f32 %v799, %v926
  %v928 = vpop.f32.mrb[0].mxu0
  %929 = vmatprep.mubr.f32.mxu0 0.0
  %930 = vmatmul.mubr.f32.gmra.mrb[0].mxu0 %v836
  %v931 = vpop.f32.mrb[0].mxu0
  %v932 = vadd.f32 %v804, %v931
  %v933 = vpop.f32.mrb[0].mxu0
  %934 = vmatprep.mubr.f32.mxu0 0.0
  %935 = vmatmul.mubr.f32.gmra.mrb[0].mxu0 %v839
  %v936 = vpop.f32.mrb[0].mxu0
  %v937 = vadd.f32 %v809, %v936
  %v938 = vpop.f32.mrb[0].mxu0
  %939 = vmatprep.mubr.f32.mxu0 0.0
  %940 = vmatmul.mubr.f32.gmra.mrb[0].mxu0 %v842
  %v941 = vpop.f32.mrb[0].mxu0
  %v942 = vadd.f32 %v814, %v941
  %v943 = vpop.f32.mrb[0].mxu0
  %944 = vmatprep.mubr.f32.mxu0 0.0
  %945 = vmatmul.mubr.f32.gmra.mrb[0].mxu0 %v845
  %v946 = vpop.f32.mrb[0].mxu0
  %v947 = vadd.f32 %v819, %v946
  %v948 = vpop.f32.mrb[0].mxu0
  %949 = vmatprep.mubr.f32.mxu0 0.0
  %950 = vmatmul.mubr.f32.gmra.mrb[0].mxu0 %v848
  %v951 = vpop.f32.mrb[0].mxu0
  %v952 = vadd.f32 %v824, %v951
  %v953 = vpop.f32.mrb[0].mxu0
  %954 = vdwg.mxu0
  %v955 = vmax.f32 %v917, 0.0
  %v956 = vmax.f32 %v922, 0.0
  %v957 = vmax.f32 %v927, 0.0
  %v958 = vmax.f32 %v932, 0.0
  %v959 = vmax.f32 %v937, 0.0
  %v960 = vmax.f32 %v942, 0.0
  %v961 = vmax.f32 %v947, 0.0
  %v962 = vmax.f32 %v952, 0.0
  %v963 = vld [vmem:[%s1 + $0xf0] sm:$0x1f]
  %v964 = vld [vmem:[%s2 + $0xf0] sm:$0x1f]
  %966 = vset.pattern.permute.xlu0 0
  %967 = vperm.xlu0 %966, %v964
  %v968 = vpop.permute.xlu0 %967
  %v971 = vsel %vm242, %v963, 0
  %973 = vmatprep.subr.mxu0 0.0
  %974 = vmatpush1.msra.mxu0 %v955
  %975 = vmatprep.subr.mxu0 0.0
  %976 = vmatpush1.msra.mxu0 %v956
  %977 = vmatprep.subr.mxu0 0.0
  %978 = vmatpush1.msra.mxu0 %v957
  %979 = vmatprep.subr.mxu0 0.0
  %980 = vmatpush1.msra.mxu0 %v958
  %981 = vmatprep.subr.mxu0 0.0
  %982 = vmatpush1.msra.mxu0 %v959
  %983 = vmatprep.subr.mxu0 0.0
  %984 = vmatpush1.msra.mxu0 %v960
  %985 = vmatprep.subr.mxu0 0.0
  %986 = vmatpush1.msra.mxu0 %v961
  %987 = vmatprep.subr.mxu0 0.0
  %988 = vmatpush1.msra.mxu0 %v962
  %989 = vmatprep.subr.mxu0 0.0
  %990 = vmatpush1.msra.mxu0 0.0
  %991 = vmatprep.subr.mxu0 0.0
  %992 = vmatpush1.msra.mxu0 0.0
  %993 = vmatprep.subr.mxu0 0.0
  %994 = vmatpush1.msra.mxu0 0.0
  %995 = vmatprep.subr.mxu0 0.0
  %996 = vmatpush1.msra.mxu0 0.0
  %997 = vmatprep.subr.mxu0 0.0
  %998 = vmatpush1.msra.mxu0 0.0
  %999 = vmatprep.subr.mxu0 0.0
  %1000 = vmatpush1.msra.mxu0 0.0
  %1001 = vmatprep.subr.mxu0 0.0
  %1002 = vmatpush1.msra.mxu0 0.0
  %1003 = vmatprep.subr.mxu0 0.0
  %1004 = vmatpush1.msra.mxu0 0.0
  %1005 = vmatprep.subr.mxu0 0.0
  %1006 = vmatpush1.msra.mxu0 0.0
  %1007 = vmatprep.subr.mxu0 0.0
  %1008 = vmatpush1.msra.mxu0 0.0
  %1009 = vmatprep.subr.mxu0 0.0
  %1010 = vmatpush1.msra.mxu0 0.0
  %1011 = vmatprep.subr.mxu0 0.0
  %1012 = vmatpush1.msra.mxu0 0.0
  %1013 = vmatprep.subr.mxu0 0.0
  %1014 = vmatpush1.msra.mxu0 0.0
  %1015 = vmatprep.subr.mxu0 0.0
  %1016 = vmatpush1.msra.mxu0 0.0
  %1017 = vmatprep.subr.mxu0 0.0
  %1018 = vmatpush1.msra.mxu0 0.0
  %1019 = vmatprep.subr.mxu0 0.0
  %1020 = vmatpush1.msra.mxu0 0.0
  %1021 = vmatprep.subr.mxu0 0.0
  %1022 = vmatpush1.msra.mxu0 0.0
  %1023 = vmatprep.subr.mxu0 0.0
  %1024 = vmatpush1.msra.mxu0 0.0
  %1025 = vmatprep.subr.mxu0 0.0
  %1026 = vmatpush1.msra.mxu0 0.0
  %1027 = vmatprep.subr.mxu0 0.0
  %1028 = vmatpush1.msra.mxu0 0.0
  %1029 = vmatprep.subr.mxu0 0.0
  %1030 = vmatpush1.msra.mxu0 0.0
  %1031 = vmatprep.subr.mxu0 0.0
  %1032 = vmatpush1.msra.mxu0 0.0
  %1033 = vmatprep.subr.mxu0 0.0
  %1034 = vmatpush1.msra.mxu0 0.0
  %1035 = vmatprep.subr.mxu0 0.0
  %1036 = vmatpush1.msra.mxu0 0.0
  %1037 = vmatprep.mubr.f32.mxu0 0.0
  %1038 = vmatmul.mubr.f32.gmra.mrb[0].mxu0 %v971
  %v1039 = vpop.f32.mrb[0].mxu0
  %v1040 = vadd.f32 %v968, %v1039
  %v1041 = vpop.f32.mrb[0].mxu0
  %1042 = vdwg.mxu0
  %1043 = vst [vmem:[%s3] sm:$0xff] %v530
  %1044 = vst [vmem:[%s3 + $0x8] sm:$0xff] %v535
  %1045 = vst [vmem:[%s3 + $0x10] sm:$0x1f] %v1040
  // Predicated region
  $region14: #{vae_forward.1} parent=0 // pred_check
    _
  $region15: #{vae_forward.1} parent=0 // pred_check_branch
    %1047 = sbr.rel (0) target = $region17
  $region16: #{vae_forward.1} parent=0 // pred_region
    _
  $region17: #{vae_forward.1} parent=0 // pred_fallthru
    _
  // Predicated region
  $region18: #{vae_forward.1} parent=0 // pred_check
    _
  $region19: #{vae_forward.1} parent=0 // pred_check_branch
    %1049 = sbr.rel (0) target = $region21
  $region20: #{vae_forward.1} parent=0 // pred_region
    _
  $region21: #{vae_forward.1} parent=0 // pred_fallthru
    _

</llo_original>
